<compile_context>
chip_gen: v5e
topology: v5e:2x2
jax: 0.10.0
libtpu: 0.0.40
codegen_flags: <defaults>
</compile_context>

<pallas_src>
import functools

import jax
import jax.numpy as jnp
from jax.experimental import pallas as pl
from jax.experimental.pallas import tpu as pltpu


def _softplus(x):
    # Numerically stable softplus, matching PyTorch's BCE-with-logits form:
    # softplus(x) = max(x, 0) + log1p(exp(-|x|))
    return jnp.maximum(x, 0.0) + jnp.log1p(jnp.exp(-jnp.abs(x)))


def _my_loss_kernel(neg_w, batch_size, num_neg, tb, tn,
                    p1_ref, p2_ref, neg_ref, pf_ref, nf_ref, out_ref):
    bi = pl.program_id(0)
    nj = pl.program_id(1)

    # Validity masks for (possibly) partial last batch tile / last N tile.
    row = jax.lax.broadcasted_iota(jnp.int32, (tb, 1), 0) + bi * tb
    row_valid = row < batch_size                                   # [TB, 1]
    col = jax.lax.broadcasted_iota(jnp.int32, (tb, tn), 1) + nj * tn
    col_valid = (col < num_neg) & row_valid                        # [TB, TN]

    p1 = p1_ref[...]                                               # [TB, F]

    # neg_aff[b, n] = sum_f p1[b, f] * neg[b, n, f] on the MXU (f32 acc);
    # bf16/f32 operands are fed directly — no f32 copy of the neg block and
    # no cross-lane XLU reduction.
    neg_aff = jnp.einsum('bqf,bnf->bqn', p1[:, None, :], neg_ref[...],
                         preferred_element_type=jnp.float32)[:, 0, :]
    # Mask logits *and* factors so garbage in padded rows/cols can never
    # produce inf/nan that survives a multiply-by-zero.
    neg_aff = jnp.where(col_valid, neg_aff, 0.0)
    nf = jnp.where(col_valid, nf_ref[...].astype(jnp.float32), 0.0)
    negative_xent = _softplus(neg_aff)                             # target=0
    partial = neg_w * jnp.sum(nf * negative_xent)

    # Positive part (tiny): counted only once per batch tile (first N step).
    p1f = p1.astype(jnp.float32)
    p2f = p2_ref[...].astype(jnp.float32)
    aff = jnp.sum(p1f * p2f, axis=1, keepdims=True)                # [TB, 1]
    aff = jnp.where(row_valid, aff, 0.0)
    pf = jnp.where(row_valid, pf_ref[...].astype(jnp.float32), 0.0)
    true_xent = _softplus(-aff)                                    # target=1
    pos_partial = jnp.sum(pf * true_xent)
    partial = partial + jnp.where(nj == 0, pos_partial, 0.0)

    # Lane-dense (8, 128) partial-sum block (unmasked vst); the scalar lives
    # at [0, 0].  The output block is resident across the "arbitrary" N axis,
    # so we init on the first N step and accumulate afterwards.
    r = jax.lax.broadcasted_iota(jnp.int32, (8, 128), 0)
    c = jax.lax.broadcasted_iota(jnp.int32, (8, 128), 1)
    block = jnp.where((r == 0) & (c == 0), partial, 0.0)

    @pl.when(nj == 0)
    def _():
        out_ref[...] = block

    @pl.when(nj > 0)
    def _():
        out_ref[...] += block


def _normalize_batch_tile(tb, B):
    """Second-to-last block dim must be a multiple of 8 unless it spans B."""
    tb = min(int(tb), B)
    if tb == B:
        return tb
    tb = max(8, (tb // 8) * 8)
    return min(tb, B)


def _tpu_hints():
    """Returns (target neg-block bytes per buffer, want >= 2 batch tiles)."""
    target, two_tiles = 4 << 20, False          # v5e / v6e default (~4 MiB)
    try:
        info = pltpu.get_tpu_info()
        vmem = getattr(info, "vmem_capacity_bytes", None)
        if vmem is not None and vmem <= (64 << 20):
            # v7x-class: 3.2 TB/s HBM -> bigger blocks amortize the ~0.35 us
            # per-grid-step cost; 2 TensorCores -> want >= 2 "parallel" steps.
            target, two_tiles = 8 << 20, True
    except Exception:
        pass
    return target, two_tiles


def _choose_tiles(B, N, F, neg_itemsize, target_bytes):
    """Pick (batch_tile, n_tile) so the neg block is ~target_bytes."""
    row_bytes = max(1, N * F * neg_itemsize)
    tb = int(target_bytes // row_bytes)
    if tb >= 8 or tb >= B:
        return _normalize_batch_tile(max(tb, 1), B), N
    # Even 8 batch rows of neg exceed the budget: tile the N axis too so the
    # VMEM footprint stays bounded and double-buffering survives.
    tb = _normalize_batch_tile(min(8, B), B)
    if N <= 128:
        # neg_factor's lane axis cannot be tiled below 128 lanes.
        # TODO(synk): tile the feature axis for pathological (small N, huge F).
        return tb, N
    tn = int(target_bytes // max(1, tb * F * neg_itemsize))
    tn = max(128, (tn // 128) * 128)
    return tb, min(tn, N)


def my_loss(pos_inputs1, pos_inputs2, neg_inputs, pos_factor, neg_factor,
            neg_sample_weights=1.0, batch_tile=None):
    B, F = pos_inputs1.shape
    _, N, _ = neg_inputs.shape
    pos_factor = jnp.asarray(pos_factor).reshape(B, 1)
    neg_factor = jnp.asarray(neg_factor).reshape(B, N)

    neg_itemsize = jnp.dtype(neg_inputs.dtype).itemsize
    p_itemsize = jnp.dtype(pos_inputs1.dtype).itemsize
    nf_itemsize = jnp.dtype(neg_factor.dtype).itemsize

    target_bytes, want_two_tiles = _tpu_hints()
    if batch_tile is None:
        tb, tn = _choose_tiles(B, N, F, neg_itemsize, target_bytes)
        # v7x: make sure there are >= 2 batch tiles so the "parallel" grid
        # axis can be sharded across both TensorCores.
        if want_two_tiles and pl.cdiv(B, tb) < 2 and B >= 16:
            tb = _normalize_batch_tile(pl.cdiv(B, 2), B)
    else:
        tb = _normalize_batch_tile(int(batch_tile), B)
        tn = N
    num_btiles = pl.cdiv(B, tb)
    num_ntiles = pl.cdiv(N, tn)

    kernel = functools.partial(
        _my_loss_kernel, float(neg_sample_weights), B, N, tb, tn)

    # VMEM budget: double-buffered input/output blocks plus in-kernel f32
    # temporaries (f32 copies of p1/p2 and the [TB, TN]-shaped intermediates).
    f32b = 4
    block_bytes = (
        2 * tb * F * p_itemsize            # p1, p2 blocks
        + tb * tn * F * neg_itemsize       # neg block
        + tb * f32b                        # pos_factor block
        + tb * tn * nf_itemsize            # neg_factor block
        + 8 * 128 * f32b                   # output block
    )
    temp_bytes = 2 * tb * F * f32b + 8 * tb * max(tn, 128) * f32b
    vmem_limit = int(min(max(2 * block_bytes + temp_bytes + (4 << 20),
                             16 << 20), 48 << 20))

    out = pl.pallas_call(
        kernel,
        out_shape=jax.ShapeDtypeStruct((num_btiles * 8, 128), jnp.float32),
        grid=(num_btiles, num_ntiles),
        in_specs=[
            pl.BlockSpec((tb, F), lambda i, j: (i, 0)),          # pos_inputs1
            pl.BlockSpec((tb, F), lambda i, j: (i, 0)),          # pos_inputs2
            pl.BlockSpec((tb, tn, F), lambda i, j: (i, j, 0)),   # neg_inputs
            pl.BlockSpec((tb, 1), lambda i, j: (i, 0)),          # pos_factor
            pl.BlockSpec((tb, tn), lambda i, j: (i, j)),         # neg_factor
        ],
        out_specs=pl.BlockSpec((8, 128), lambda i, j: (i, 0)),
        compiler_params=pltpu.CompilerParams(
            dimension_semantics=("parallel", "arbitrary"),
            vmem_limit_bytes=vmem_limit,
        ),
    )(pos_inputs1, pos_inputs2, neg_inputs, pos_factor, neg_factor)

    # Tiny final reduction over per-tile f32 partial sums, in plain XLA.
    return jnp.sum(out)


def _my_loss_ref(p1, p2, neg, pf, nf, neg_w=1.0):
    p1 = p1.astype(jnp.float32)
    p2 = p2.astype(jnp.float32)
    neg = neg.astype(jnp.float32)
    aff = jnp.sum(p1 * p2, axis=1)
    neg_aff = jnp.sum(p1[:, None, :] * neg, axis=2)
    true_xent = _softplus(-aff)
    negative_xent = _softplus(neg_aff)
    return jnp.sum(pf * true_xent) + neg_w * jnp.sum(nf * negative_xent)


if __name__ == "__main__":
    B, N, F = 32, 8, 32
    key = jax.random.PRNGKey(0)
    k1, k2, k3, k4, k5 = jax.random.split(key, 5)

    pos_inputs1 = jax.random.normal(k1, (B, F), dtype=jnp.float32)
    pos_inputs2 = jax.random.normal(k2, (B, F), dtype=jnp.float32)
    neg_inputs = jax.random.normal(k3, (B, N, F), dtype=jnp.float32)
    pos_factor = jax.random.uniform(k4, (B,), dtype=jnp.float32)
    neg_factor = jax.random.uniform(k5, (B, N), dtype=jnp.float32)

    ref = _my_loss_ref(pos_inputs1, pos_inputs2, neg_inputs, pos_factor,
                       neg_factor, neg_w=1.0)

    # Explicitly tiled / pipelined path: 4 grid steps over the batch.
    loss = my_loss(pos_inputs1, pos_inputs2, neg_inputs, pos_factor,
                   neg_factor, neg_sample_weights=1.0, batch_tile=8)
    jax.block_until_ready(loss)
    assert jnp.allclose(loss, ref, rtol=1e-5, atol=1e-5), (loss, ref)

    # Auto-tiled path (generation-aware tile sizing).
    loss2 = my_loss(pos_inputs1, pos_inputs2, neg_inputs, pos_factor,
                    neg_factor, neg_sample_weights=1.0)
    jax.block_until_ready(loss2)
    assert jnp.allclose(loss2, ref, rtol=1e-5, atol=1e-5), (loss2, ref)

    # Mixed-precision path: bf16 activations stream half the HBM bytes and
    # feed the MXU contraction directly (f32 accumulation).
    p1b = pos_inputs1.astype(jnp.bfloat16)
    p2b = pos_inputs2.astype(jnp.bfloat16)
    negb = neg_inputs.astype(jnp.bfloat16)
    ref_bf16 = _my_loss_ref(p1b, p2b, negb, pos_factor, neg_factor, neg_w=1.0)
    loss3 = my_loss(p1b, p2b, negb, pos_factor, neg_factor,
                    neg_sample_weights=1.0)
    jax.block_until_ready(loss3)
    assert jnp.allclose(loss3, ref_bf16, rtol=2e-2, atol=1e-2), (loss3, ref_bf16)

    print("KERNEL_OK")
</pallas_src>

<mosaic_0001>
module attributes {stable_mosaic.version = 11 : i64} {
  func.func @_my_loss_kernel(%arg0: i32, %arg1: i32, %arg2: memref<8x32xf32, #tpu.memory_space<vmem>>, %arg3: memref<8x32xf32, #tpu.memory_space<vmem>>, %arg4: memref<8x8x32xf32, #tpu.memory_space<vmem>>, %arg5: memref<8x1xf32, #tpu.memory_space<vmem>>, %arg6: memref<8x8xf32, #tpu.memory_space<vmem>>, %arg7: memref<8x128xf32, #tpu.memory_space<vmem>>) attributes {dimension_semantics = [#tpu.dimension_semantics<parallel>, #tpu.dimension_semantics<arbitrary>], iteration_bounds = array<i64: 4, 1>, scalar_prefetch = 0 : i64, scratch_operands = 0 : i64, tpu.core_type = #tpu.core_type<tc>, window_params = [{transform_indices = @transform_0, window_bounds = array<i64: 8, 32>}, {transform_indices = @transform_1, window_bounds = array<i64: 8, 32>}, {transform_indices = @transform_2, window_bounds = array<i64: 8, 8, 32>}, {transform_indices = @transform_3, window_bounds = array<i64: 8, 1>}, {transform_indices = @transform_4, window_bounds = array<i64: 8, 8>}, {transform_indices = @transform_5, window_bounds = array<i64: 8, 128>}]} {
    %0 = tpu.iota {dimensions = array<i32: 0>} : vector<8x1xi32>
    %c8_i32 = arith.constant 8 : i32
    %1 = arith.muli %arg0, %c8_i32 : i32
    %2 = vector.broadcast %1 : i32 to vector<8x1xi32>
    %3 = arith.addi %0, %2 : vector<8x1xi32>
    %c32_i32 = arith.constant 32 : i32
    %4 = vector.broadcast %c32_i32 : i32 to vector<8x1xi32>
    %5 = arith.cmpi slt, %3, %4 : vector<8x1xi32>
    %6 = tpu.iota {dimensions = array<i32: 1>} : vector<8x8xi32>
    %c8_i32_0 = arith.constant 8 : i32
    %7 = arith.muli %arg1, %c8_i32_0 : i32
    %8 = vector.broadcast %7 : i32 to vector<8x8xi32>
    %9 = arith.addi %6, %8 : vector<8x8xi32>
    %c8_i32_1 = arith.constant 8 : i32
    %10 = vector.broadcast %c8_i32_1 : i32 to vector<8x8xi32>
    %11 = arith.cmpi slt, %9, %10 : vector<8x8xi32>
    %12 = vector.broadcast %5 : vector<8x1xi1> to vector<8x8xi1>
    %13 = arith.andi %11, %12 : vector<8x8xi1>
    %c0 = arith.constant 0 : index
    %c0_2 = arith.constant 0 : index
    %14 = vector.load %arg2[%c0, %c0_2] : memref<8x32xf32, #tpu.memory_space<vmem>>, vector<8x32xf32>
    %15 = vector.shape_cast %14 : vector<8x32xf32> to vector<8x1x32xf32>
    %c0_3 = arith.constant 0 : index
    %c0_4 = arith.constant 0 : index
    %c0_5 = arith.constant 0 : index
    %16 = vector.load %arg4[%c0_3, %c0_4, %c0_5] : memref<8x8x32xf32, #tpu.memory_space<vmem>>, vector<8x8x32xf32>
    "tpu.trace_start"() <{level = 10 : i32, message = "bqf,bnf->bqn"}> : () -> ()
    %cst = arith.constant dense<0.000000e+00> : vector<8x1x8xf32>
    %17 = tpu.matmul %15, %16, %cst {dimension_numbers = #tpu.dot_dimension_numbers<[2], [2], [1], [1], [0, 0, 0, 1, 1, 1], [0], [0]>} : vector<8x1x32xf32>, vector<8x8x32xf32>, vector<8x1x8xf32> -> vector<8x1x8xf32>
    "tpu.trace_stop"() : () -> ()
    %18 = vector.shape_cast %17 : vector<8x1x8xf32> to vector<8x8xf32>
    %cst_6 = arith.constant 0.000000e+00 : f32
    %19 = vector.broadcast %cst_6 : f32 to vector<8x8xf32>
    %20 = arith.select %13, %18, %19 : vector<8x8xi1>, vector<8x8xf32>
    %c0_7 = arith.constant 0 : index
    %c0_8 = arith.constant 0 : index
    %21 = vector.load %arg6[%c0_7, %c0_8] : memref<8x8xf32, #tpu.memory_space<vmem>>, vector<8x8xf32>
    %cst_9 = arith.constant 0.000000e+00 : f32
    %22 = vector.broadcast %cst_9 : f32 to vector<8x8xf32>
    %23 = arith.select %13, %21, %22 : vector<8x8xi1>, vector<8x8xf32>
    %cst_10 = arith.constant 0.000000e+00 : f32
    %24 = vector.broadcast %cst_10 : f32 to vector<8x8xf32>
    %25 = arith.maximumf %20, %24 : vector<8x8xf32>
    %26 = math.absf %20 : vector<8x8xf32>
    %cst_11 = arith.constant 0.000000e+00 : f32
    %27 = vector.broadcast %cst_11 : f32 to vector<8x8xf32>
    %28 = arith.subf %27, %26 : vector<8x8xf32>
    %29 = math.exp %28 : vector<8x8xf32>
    %30 = math.log1p %29 : vector<8x8xf32>
    %31 = arith.addf %25, %30 : vector<8x8xf32>
    %32 = arith.mulf %23, %31 : vector<8x8xf32>
    %33 = vector.shape_cast %32 : vector<8x8xf32> to vector<1x8x8xf32>
    %cst_12 = arith.constant dense<0.000000e+00> : vector<1xf32>
    %34 = vector.multi_reduction <add>, %33, %cst_12 [1, 2] : vector<1x8x8xf32> to vector<1xf32>
    %35 = vector.shape_cast %34 : vector<1xf32> to vector<1x1x1xf32>
    %36 = vector.extract %35[0, 0, 0] : f32 from vector<1x1x1xf32>
    %cst_13 = arith.constant 1.000000e+00 : f32
    %37 = arith.mulf %cst_13, %36 : f32
    %c0_14 = arith.constant 0 : index
    %c0_15 = arith.constant 0 : index
    %38 = vector.load %arg3[%c0_14, %c0_15] : memref<8x32xf32, #tpu.memory_space<vmem>>, vector<8x32xf32>
    %39 = arith.mulf %14, %38 : vector<8x32xf32>
    %cst_16 = arith.constant dense<0.000000e+00> : vector<8xf32>
    %40 = vector.multi_reduction <add>, %39, %cst_16 [1] : vector<8x32xf32> to vector<8xf32>
    %41 = vector.shape_cast %40 : vector<8xf32> to vector<8x1xf32>
    %cst_17 = arith.constant 0.000000e+00 : f32
    %42 = vector.broadcast %cst_17 : f32 to vector<8x1xf32>
    %43 = arith.select %5, %41, %42 : vector<8x1xi1>, vector<8x1xf32>
    %c0_18 = arith.constant 0 : index
    %c0_19 = arith.constant 0 : index
    %44 = vector.load %arg5[%c0_18, %c0_19] : memref<8x1xf32, #tpu.memory_space<vmem>>, vector<8x1xf32>
    %cst_20 = arith.constant 0.000000e+00 : f32
    %45 = vector.broadcast %cst_20 : f32 to vector<8x1xf32>
    %46 = arith.select %5, %44, %45 : vector<8x1xi1>, vector<8x1xf32>
    %cst_21 = arith.constant 0.000000e+00 : f32
    %47 = vector.broadcast %cst_21 : f32 to vector<8x1xf32>
    %48 = arith.subf %47, %43 : vector<8x1xf32>
    %cst_22 = arith.constant 0.000000e+00 : f32
    %49 = vector.broadcast %cst_22 : f32 to vector<8x1xf32>
    %50 = arith.maximumf %48, %49 : vector<8x1xf32>
    %51 = math.absf %48 : vector<8x1xf32>
    %cst_23 = arith.constant 0.000000e+00 : f32
    %52 = vector.broadcast %cst_23 : f32 to vector<8x1xf32>
    %53 = arith.subf %52, %51 : vector<8x1xf32>
    %54 = math.exp %53 : vector<8x1xf32>
    %55 = math.log1p %54 : vector<8x1xf32>
    %56 = arith.addf %50, %55 : vector<8x1xf32>
    %57 = arith.mulf %46, %56 : vector<8x1xf32>
    %58 = vector.shape_cast %57 : vector<8x1xf32> to vector<1x8x1xf32>
    %cst_24 = arith.constant dense<0.000000e+00> : vector<1xf32>
    %59 = vector.multi_reduction <add>, %58, %cst_24 [1, 2] : vector<1x8x1xf32> to vector<1xf32>
    %60 = vector.shape_cast %59 : vector<1xf32> to vector<1x1x1xf32>
    %61 = vector.extract %60[0, 0, 0] : f32 from vector<1x1x1xf32>
    %c0_i32 = arith.constant 0 : i32
    %62 = arith.cmpi eq, %arg1, %c0_i32 : i32
    %cst_25 = arith.constant 0.000000e+00 : f32
    %63 = arith.select %62, %61, %cst_25 : f32
    %64 = arith.addf %37, %63 : f32
    %65 = tpu.iota {dimensions = array<i32: 0>} : vector<8x128xi32>
    %66 = tpu.iota {dimensions = array<i32: 1>} : vector<8x128xi32>
    %c0_i32_26 = arith.constant 0 : i32
    %67 = vector.broadcast %c0_i32_26 : i32 to vector<8x128xi32>
    %68 = arith.cmpi eq, %65, %67 : vector<8x128xi32>
    %c0_i32_27 = arith.constant 0 : i32
    %69 = vector.broadcast %c0_i32_27 : i32 to vector<8x128xi32>
    %70 = arith.cmpi eq, %66, %69 : vector<8x128xi32>
    %71 = arith.andi %68, %70 : vector<8x128xi1>
    %cst_28 = arith.constant 0.000000e+00 : f32
    %72 = vector.broadcast %64 : f32 to vector<8x128xf32>
    %73 = vector.broadcast %cst_28 : f32 to vector<8x128xf32>
    %74 = arith.select %71, %72, %73 : vector<8x128xi1>, vector<8x128xf32>
    %c0_i32_29 = arith.constant 0 : i32
    %75 = arith.cmpi eq, %arg1, %c0_i32_29 : i32
    %76 = arith.extui %75 : i1 to i32
    %c0_i32_30 = arith.constant 0 : i32
    %77 = arith.cmpi ne, %76, %c0_i32_30 : i32
    scf.if %77 {
      %c0_33 = arith.constant 0 : index
      %c0_34 = arith.constant 0 : index
      %81 = vector.load %arg7[%c0_33, %c0_34] : memref<8x128xf32, #tpu.memory_space<vmem>>, vector<8x128xf32>
      tpu.vector_store %arg7[%c0_33, %c0_34], %74 {strides = array<i32>} : memref<8x128xf32, #tpu.memory_space<vmem>>, vector<8x128xf32>,
    } else {
    }
    %c0_i32_31 = arith.constant 0 : i32
    %78 = arith.cmpi sgt, %arg1, %c0_i32_31 : i32
    %79 = arith.extui %78 : i1 to i32
    %c0_i32_32 = arith.constant 0 : i32
    %80 = arith.cmpi ne, %79, %c0_i32_32 : i32
    scf.if %80 {
      %c0_33 = arith.constant 0 : index
      %c0_34 = arith.constant 0 : index
      %81 = vector.load %arg7[%c0_33, %c0_34] : memref<8x128xf32, #tpu.memory_space<vmem>>, vector<8x128xf32>
      %82 = arith.addf %81, %74 : vector<8x128xf32>
      %c0_35 = arith.constant 0 : index
      %c0_36 = arith.constant 0 : index
      %83 = vector.load %arg7[%c0_35, %c0_36] : memref<8x128xf32, #tpu.memory_space<vmem>>, vector<8x128xf32>
      tpu.vector_store %arg7[%c0_35, %c0_36], %82 {strides = array<i32>} : memref<8x128xf32, #tpu.memory_space<vmem>>, vector<8x128xf32>,
    } else {
    }
    return
  }
  func.func @transform_0(%arg0: i32, %arg1: i32) -> (i32, i32) {
    %c0_i32 = arith.constant 0 : i32
    %c0_i32_0 = arith.constant 0 : i32
    return %arg0, %c0_i32 : i32, i32
  }
  func.func @transform_1(%arg0: i32, %arg1: i32) -> (i32, i32) {
    %c0_i32 = arith.constant 0 : i32
    %c0_i32_0 = arith.constant 0 : i32
    return %arg0, %c0_i32 : i32, i32
  }
  func.func @transform_2(%arg0: i32, %arg1: i32) -> (i32, i32, i32) {
    %c0_i32 = arith.constant 0 : i32
    %c0_i32_0 = arith.constant 0 : i32
    return %arg0, %arg1, %c0_i32 : i32, i32, i32
  }
  func.func @transform_3(%arg0: i32, %arg1: i32) -> (i32, i32) {
    %c0_i32 = arith.constant 0 : i32
    %c0_i32_0 = arith.constant 0 : i32
    return %arg0, %c0_i32 : i32, i32
  }
  func.func @transform_4(%arg0: i32, %arg1: i32) -> (i32, i32) {
    %c0_i32 = arith.constant 0 : i32
    return %arg0, %arg1 : i32, i32
  }
  func.func @transform_5(%arg0: i32, %arg1: i32) -> (i32, i32) {
    %c0_i32 = arith.constant 0 : i32
    %c0_i32_0 = arith.constant 0 : i32
    return %arg0, %c0_i32 : i32, i32
  }
}

</mosaic_0001>

<llo_original>
// kernel: tpu_custom_call.1
$region0: #{tpu_custom_call.1}
  #allocation0 [shape = 'u32[]', space=smem, size = 0x4, offset = 0x4, fixed_abs, tag = 'smem constant byte address 0x4 - core index']
  #allocation1 [shape = 'u32[72,128]{1,0:T(1,128)}', space=vmem, size = 0x9000, scoped, tag = 'internal scratch']
  %s0 = inlined_call_operand.vmem [shape: f32[32,32], index: 0, kind: input, shape index: {}]
  %s1 = inlined_call_operand.vmem [shape: f32[32,32], index: 1, kind: input, shape index: {}]
  %s2 = inlined_call_operand.hbm [shape: f32[32,8,32], index: 2, kind: input, shape index: {}]
  %s3 = inlined_call_operand.vmem [shape: f32[32,1], index: 3, kind: input, shape index: {}]
  %s4 = inlined_call_operand.vmem [shape: f32[32,8], index: 4, kind: input, shape index: {}]
  %s5 = inlined_call_operand.hbm [shape: f32[32,128], index: 5, kind: output, shape index: {}]
  %s6 = sld [smem:[#allocation0]]
  $region65: #{tpu_custom_call.1} parent=0
    _
  %s8 = ssub.s32 1, %s6
  %s9 = scalar_select 0, %s8, %s6
  $region1: #{tpu_custom_call.1} parent=0
    #allocation2 [shape = 'u8[65536]{0}', space=vmem, size = 0x10000, scoped, tag = 'input window, operand 2']
    #allocation3 [shape = 's32[2]{0}', space=sflag, size = 0x8, scoped, tag = 'scoped memory for tpu_custom_call.1']
    #allocation4 [shape = 's32[2]{0}', space=sflag, size = 0x8, scoped, tag = 'scoped memory for tpu_custom_call.1']
    #allocation5 [shape = 'u8[8192]{0}', space=vmem, size = 0x2000, scoped, tag = 'output window, operand 0']
    %10 = vsyncpa [#allocation3], 0
    %s11 = scalar_lea.sflag [#allocation3], 1
    %12 = vsyncpa %s11, 0
    %13 = vsyncpa [#allocation4], 0
    %s14 = scalar_lea.sflag [#allocation4], 1
    %15 = vsyncpa %s14, 0
    loop: start=0, step=1, limit=6
    $region2: #{tpu_custom_call.1} parent=1 // loop_pre_header
      _
    $region3: #{tpu_custom_call.1} parent=1 // loop_header
      %s17 = sphi 0, %s21
      %p18 = scmp.ge.s32.totalorder %s17, 6
      %s24 = sphi 0, %s36
      %s25 = sphi 0, %s32
      %s26 = sphi 0, %s24
      %s27 = sphi 0, %s25
      %s28 = sphi 0, %s26
      %s29 = sphi 0, %s27
      %s39 = sphi 0, %s41
      %s42 = sphi 0, %s39
      %s43 = sphi 0, %s42
      %s59 = sphi 0, %s43
      %s65 = sphi 0, %s67
      %s68 = sphi 0, %s65
      %s69 = sphi 0, %s68
      %s85 = sphi 0, %s69
      %s93 = sphi 0, %s95
      %s96 = sphi 0, %s93
      %s97 = sphi 0, %s96
      %s113 = sphi 0, %s97
      %s119 = sphi 0, %s121
      %s122 = sphi 0, %s119
      %s123 = sphi 0, %s122
      %s139 = sphi 0, %s123
      %s147 = sphi 0, %s149
      %s150 = sphi 0, %s147
      %s151 = sphi 0, %s150
      %s167 = sphi 0, %s151
      %s173 = sphi 0, %s175
      %s176 = sphi 0, %s173
      %s177 = sphi 0, %s176
      %s193 = sphi 0, %s177
    $region4: #{tpu_custom_call.1} parent=1 // loop_header_branch
      %20 = sbr.rel (%p18) target = $region8
    $region5: #{tpu_custom_call.1} parent=1 // loop_body
      %s22 = ssub.s32 %s17, 1
      %s23 = ssub.s32 %s17, 2
      %s30 = sadd.s32 1, %s25
      %p31 = scmp.ge.s32.totalorder %s30, 1
      %s32 = scalar_select %p31, 0, %s30
      %s33 = sadd.s32 1, %s24
      %s34 = scalar_select %p31, %s33, %s24
      %p35 = scmp.ge.s32.totalorder %s34, 4
      %s36 = scalar_select %p35, 0, %s34
      %s37 = ssub.s32 %s24, %s36
      %p38 = scmp.eq.s32.totalorder %s37, 0
      %s40 = sadd.s32 %s39, 1
      %s41 = scalar_select %p38, %s39, %s40
      %p44 = pneg %p38
      %p45 = scmp.eq.s32.totalorder %s17, 3
      %p46 = por %p44, %p45
      %p47 = scmp.ne.s32.totalorder %s39, %s42
      %p48 = scmp.eq.s32.totalorder %s17, 0
      %p49 = por %p47, %p48
      %p50 = scmp.ne.s32.totalorder %s39, %s42
      %p51 = scmp.eq.s32.totalorder %s22, 3
      %p52 = por %p50, %p51
      %p53 = scmp.ne.s32.totalorder %s42, %s43
      %p54 = scmp.eq.s32.totalorder %s22, 0
      %p55 = por %p53, %p54
      %p56 = scmp.ne.s32.totalorder %s42, %s43
      %p57 = scmp.eq.s32.totalorder %s23, 3
      %p58 = por %p56, %p57
      %p60 = scmp.ne.s32.totalorder %s43, %s59
      %p61 = scmp.eq.s32.totalorder %s23, 0
      %p62 = por %p60, %p61
      %s63 = ssub.s32 %s24, %s36
      %p64 = scmp.eq.s32.totalorder %s63, 0
      %s66 = sadd.s32 %s65, 1
      %s67 = scalar_select %p64, %s65, %s66
      %p70 = pneg %p64
      %p71 = scmp.eq.s32.totalorder %s17, 3
      %p72 = por %p70, %p71
      %p73 = scmp.ne.s32.totalorder %s65, %s68
      %p74 = scmp.eq.s32.totalorder %s17, 0
      %p75 = por %p73, %p74
      %p76 = scmp.ne.s32.totalorder %s65, %s68
      %p77 = scmp.eq.s32.totalorder %s22, 3
      %p78 = por %p76, %p77
      %p79 = scmp.ne.s32.totalorder %s68, %s69
      %p80 = scmp.eq.s32.totalorder %s22, 0
      %p81 = por %p79, %p80
      %p82 = scmp.ne.s32.totalorder %s68, %s69
      %p83 = scmp.eq.s32.totalorder %s23, 3
      %p84 = por %p82, %p83
      %p86 = scmp.ne.s32.totalorder %s69, %s85
      %p87 = scmp.eq.s32.totalorder %s23, 0
      %p88 = por %p86, %p87
      %s89 = ssub.s32 %s24, %s36
      %s90 = ssub.s32 %s25, %s32
      %s91 = sor.u32 %s89, %s90
      %p92 = scmp.eq.s32.totalorder %s91, 0
      %s94 = sadd.s32 %s93, 1
      %s95 = scalar_select %p92, %s93, %s94
      %p98 = pneg %p92
      %p99 = scmp.eq.s32.totalorder %s17, 3
      %p100 = por %p98, %p99
      %p101 = scmp.ne.s32.totalorder %s93, %s96
      %p102 = scmp.eq.s32.totalorder %s17, 0
      %p103 = por %p101, %p102
      %p104 = scmp.ne.s32.totalorder %s93, %s96
      %p105 = scmp.eq.s32.totalorder %s22, 3
      %p106 = por %p104, %p105
      %p107 = scmp.ne.s32.totalorder %s96, %s97
      %p108 = scmp.eq.s32.totalorder %s22, 0
      %p109 = por %p107, %p108
      %p110 = scmp.ne.s32.totalorder %s96, %s97
      %p111 = scmp.eq.s32.totalorder %s23, 3
      %p112 = por %p110, %p111
      %p114 = scmp.ne.s32.totalorder %s97, %s113
      %p115 = scmp.eq.s32.totalorder %s23, 0
      %p116 = por %p114, %p115
      %s117 = ssub.s32 %s24, %s36
      %p118 = scmp.eq.s32.totalorder %s117, 0
      %s120 = sadd.s32 %s119, 1
      %s121 = scalar_select %p118, %s119, %s120
      %p124 = pneg %p118
      %p125 = scmp.eq.s32.totalorder %s17, 3
      %p126 = por %p124, %p125
      %p127 = scmp.ne.s32.totalorder %s119, %s122
      %p128 = scmp.eq.s32.totalorder %s17, 0
      %p129 = por %p127, %p128
      %p130 = scmp.ne.s32.totalorder %s119, %s122
      %p131 = scmp.eq.s32.totalorder %s22, 3
      %p132 = por %p130, %p131
      %p133 = scmp.ne.s32.totalorder %s122, %s123
      %p134 = scmp.eq.s32.totalorder %s22, 0
      %p135 = por %p133, %p134
      %p136 = scmp.ne.s32.totalorder %s122, %s123
      %p137 = scmp.eq.s32.totalorder %s23, 3
      %p138 = por %p136, %p137
      %p140 = scmp.ne.s32.totalorder %s123, %s139
      %p141 = scmp.eq.s32.totalorder %s23, 0
      %p142 = por %p140, %p141
      %s143 = ssub.s32 %s24, %s36
      %s144 = ssub.s32 %s25, %s32
      %s145 = sor.u32 %s143, %s144
      %p146 = scmp.eq.s32.totalorder %s145, 0
      %s148 = sadd.s32 %s147, 1
      %s149 = scalar_select %p146, %s147, %s148
      %p152 = pneg %p146
      %p153 = scmp.eq.s32.totalorder %s17, 3
      %p154 = por %p152, %p153
      %p155 = scmp.ne.s32.totalorder %s147, %s150
      %p156 = scmp.eq.s32.totalorder %s17, 0
      %p157 = por %p155, %p156
      %p158 = scmp.ne.s32.totalorder %s147, %s150
      %p159 = scmp.eq.s32.totalorder %s22, 3
      %p160 = por %p158, %p159
      %p161 = scmp.ne.s32.totalorder %s150, %s151
      %p162 = scmp.eq.s32.totalorder %s22, 0
      %p163 = por %p161, %p162
      %p164 = scmp.ne.s32.totalorder %s150, %s151
      %p165 = scmp.eq.s32.totalorder %s23, 3
      %p166 = por %p164, %p165
      %p168 = scmp.ne.s32.totalorder %s151, %s167
      %p169 = scmp.eq.s32.totalorder %s23, 0
      %p170 = por %p168, %p169
      %s171 = ssub.s32 %s24, %s36
      %p172 = scmp.eq.s32.totalorder %s171, 0
      %s174 = sadd.s32 %s173, 1
      %s175 = scalar_select %p172, %s173, %s174
      %p178 = pneg %p172
      %p179 = scmp.eq.s32.totalorder %s17, 3
      %p180 = por %p178, %p179
      %p181 = scmp.ne.s32.totalorder %s173, %s176
      %p182 = scmp.eq.s32.totalorder %s17, 0
      %p183 = por %p181, %p182
      %p184 = scmp.ne.s32.totalorder %s173, %s176
      %p185 = scmp.eq.s32.totalorder %s22, 3
      %p186 = por %p184, %p185
      %p187 = scmp.ne.s32.totalorder %s176, %s177
      %p188 = scmp.eq.s32.totalorder %s22, 0
      %p189 = por %p187, %p188
      %p190 = scmp.ne.s32.totalorder %s176, %s177
      %p191 = scmp.eq.s32.totalorder %s23, 3
      %p192 = por %p190, %p191
      %p194 = scmp.ne.s32.totalorder %s177, %s193
      %p195 = scmp.eq.s32.totalorder %s23, 0
      %p196 = por %p194, %p195
      %p197 = scmp.le.s32.totalorder 1, %s17
      %p198 = scmp.lt.s32.totalorder %s17, 5
      %p199 = pnand %p197, %p198
      %p200 = pneg %p199
      // Predicated region
      $region9: #{tpu_custom_call.1} parent=5 // pred_check
        _
      $region10: #{tpu_custom_call.1} parent=5 // pred_check_branch
        %202 = sbr.rel (%p199) target = $region12
      $region11: #{tpu_custom_call.1} parent=5 // pred_region
        %s203 = ssub.s32 %s17, 1
      $region12: #{tpu_custom_call.1} parent=5 // pred_fallthru
        _
      %p204 = scmp.lt.s32.totalorder %s17, 4
      // Predicated region
      $region13: #{tpu_custom_call.1} parent=5 // pred_check
        %p205 = pneg %p204
      $region14: #{tpu_custom_call.1} parent=5 // pred_check_branch
        %207 = sbr.rel (%p205) target = $region16
      $region15: #{tpu_custom_call.1} parent=5 // pred_region
        // Predicated region
        $region17: #{tpu_custom_call.1} parent=15 // pred_check
          %p208 = pneg %p49
        $region18: #{tpu_custom_call.1} parent=15 // pred_check_branch
          %210 = sbr.rel (%p208) target = $region20
        $region19: #{tpu_custom_call.1} parent=15 // pred_region
          %p211 = scmp.lt.s32.totalorder %s24, 3
          %s212 = scalar_select %p211, %s24, 3
          %s213 = smul.addr %s212, 8
          %s214 = scalar_lea.vmem %s0, %s213
        $region20: #{tpu_custom_call.1} parent=15 // pred_fallthru
          _
        // Predicated region
        $region21: #{tpu_custom_call.1} parent=15 // pred_check
          %p215 = pneg %p75
        $region22: #{tpu_custom_call.1} parent=15 // pred_check_branch
          %217 = sbr.rel (%p215) target = $region24
        $region23: #{tpu_custom_call.1} parent=15 // pred_region
          %p218 = scmp.lt.s32.totalorder %s24, 3
          %s219 = scalar_select %p218, %s24, 3
          %s220 = smul.addr %s219, 8
          %s221 = scalar_lea.vmem %s1, %s220
        $region24: #{tpu_custom_call.1} parent=15 // pred_fallthru
          _
        // Predicated region
        $region25: #{tpu_custom_call.1} parent=15 // pred_check
          %p222 = pneg %p103
        $region26: #{tpu_custom_call.1} parent=15 // pred_check_branch
          %224 = sbr.rel (%p222) target = $region28
        $region27: #{tpu_custom_call.1} parent=15 // pred_region
          %s225 = sand.u32 %s93, 1
          %s226 = scalar_lea.sflag [#allocation3], %s225
          %s227 = sand.u32 %s93, 1
          %s228 = smul.addr %s227, 64
          %s229 = scalar_lea.vmem [#allocation2], %s228
          %s230 = smul.u32 8, %s24
          %232 = vsyncadd %s226, 0
          %s233 = sadd.s32 %s25, %s230
          %s234 = smul.addr %s233, 8
          %s235 = scalar_lea.hbm %s2, %s234
          %s236 = sshll.u32 %s235, 4
          %s237 = int_to_ptr.hbm [resolvable:$true] %s236
          %s238 = sshll.u32 %s229, 4
          %s239 = int_to_ptr.vmem [resolvable:$true] %s238
          %244 = dma.hbm_to_vmem [thread:$0]  %s237, 1024, %s239, %s226, 128, 128, 8
        $region28: #{tpu_custom_call.1} parent=15 // pred_fallthru
          _
        // Predicated region
        $region29: #{tpu_custom_call.1} parent=15 // pred_check
          %p245 = pneg %p129
        $region30: #{tpu_custom_call.1} parent=15 // pred_check_branch
          %247 = sbr.rel (%p245) target = $region32
        $region31: #{tpu_custom_call.1} parent=15 // pred_region
          %p248 = scmp.lt.s32.totalorder %s24, 3
          %s249 = scalar_select %p248, %s24, 3
          %s250 = smul.addr %s249, 8
          %s251 = scalar_lea.vmem %s3, %s250
        $region32: #{tpu_custom_call.1} parent=15 // pred_fallthru
          _
        // Predicated region
        $region33: #{tpu_custom_call.1} parent=15 // pred_check
          %p252 = pneg %p157
        $region34: #{tpu_custom_call.1} parent=15 // pred_check_branch
          %254 = sbr.rel (%p252) target = $region36
        $region35: #{tpu_custom_call.1} parent=15 // pred_region
          %p255 = scmp.lt.s32.totalorder %s24, 3
          %s256 = scalar_select %p255, %s24, 3
          %p257 = scmp.lt.s32.totalorder %s25, 0
          %s258 = scalar_select %p257, %s25, 0
          %s259 = sadd.s32 %s258, %s256
          %s260 = smul.addr %s259, 8
          %s261 = scalar_lea.vmem %s4, %s260
        $region36: #{tpu_custom_call.1} parent=15 // pred_fallthru
          _
      $region16: #{tpu_custom_call.1} parent=5 // pred_fallthru
        _
      %p262 = scmp.le.s32.totalorder 1, %s17
      %p263 = scmp.lt.s32.totalorder %s17, 5
      %p264 = pnand %p262, %p263
      %p265 = pneg %p264
      // Predicated region
      $region37: #{tpu_custom_call.1} parent=5 // pred_check
        _
      $region38: #{tpu_custom_call.1} parent=5 // pred_check_branch
        %267 = sbr.rel (%p264) target = $region40
      $region39: #{tpu_custom_call.1} parent=5 // pred_region
        %s268 = ssub.s32 %s17, 1
        %s269 = sand.u32 %s96, 1
        %s270 = scalar_lea.sflag [#allocation3], %s269
        %s271 = sand.u32 %s96, 1
        %s272 = smul.addr %s271, 64
        %s273 = scalar_lea.vmem [#allocation2], %s272
        // Predicated region
        $region41: #{tpu_custom_call.1} parent=39 // pred_check
          %p274 = pneg %p109
        $region42: #{tpu_custom_call.1} parent=39 // pred_check_branch
          %276 = sbr.rel (%p274) target = $region44
        $region43: #{tpu_custom_call.1} parent=39 // pred_region
          %278 = dma.done %s270, 1024
        $region44: #{tpu_custom_call.1} parent=39 // pred_fallthru
          _
        %p279 = scmp.lt.s32.totalorder %s26, 3
        %s280 = scalar_select %p279, %s26, 3
        %s281 = smul.addr %s280, 8
        %s282 = scalar_lea.vmem %s0, %s281
        %p283 = pneg %p55
        %p284 = pneg %p52
        %p285 = scmp.lt.s32.totalorder %s26, 3
        %s286 = scalar_select %p285, %s26, 3
        %s287 = smul.addr %s286, 8
        %s288 = scalar_lea.vmem %s1, %s287
        %p289 = pneg %p81
        %p290 = pneg %p78
        %s291 = sand.u32 %s96, 1
        %s292 = scalar_lea.sflag [#allocation3], %s291
        %s293 = sand.u32 %s96, 1
        %s294 = smul.addr %s293, 64
        %s295 = scalar_lea.vmem [#allocation2], %s294
        %p296 = pneg %p109
        %p297 = pneg %p106
        %p298 = scmp.lt.s32.totalorder %s26, 3
        %s299 = scalar_select %p298, %s26, 3
        %s300 = smul.addr %s299, 8
        %s301 = scalar_lea.vmem %s3, %s300
        %p302 = pneg %p135
        %p303 = pneg %p132
        %p304 = scmp.lt.s32.totalorder %s26, 3
        %s305 = scalar_select %p304, %s26, 3
        %p306 = scmp.lt.s32.totalorder %s27, 0
        %s307 = scalar_select %p306, %s27, 0
        %s308 = sadd.s32 %s307, %s305
        %s309 = smul.addr %s308, 8
        %s310 = scalar_lea.vmem %s4, %s309
        %p311 = pneg %p163
        %p312 = pneg %p160
        %p313 = pneg %p189
        %p314 = pneg %p186
        %s315 = sand.u32 %s176, 1
        %s316 = scalar_lea.sflag [#allocation4], %s315
        %s317 = sand.u32 %s176, 1
        %s318 = smul.addr %s317, 8
        %s319 = scalar_lea.vmem [#allocation5], %s318
        %p320 = scmp.lt.s32.totalorder %s26, 3
        %s321 = scalar_select %p320, %s26, 3
        %s322 = smul.addr %s321, 8
        %s323 = scalar_lea.vmem %s0, %s322
        %p324 = scmp.lt.s32.totalorder %s26, 3
        %s325 = scalar_select %p324, %s26, 3
        %s326 = smul.addr %s325, 8
        %s327 = scalar_lea.vmem %s1, %s326
        %s328 = smul.u32 8, %s26
        %p329 = scmp.lt.s32.totalorder %s26, 3
        %s330 = scalar_select %p329, %s26, 3
        %s331 = smul.addr %s330, 8
        %s332 = scalar_lea.vmem %s3, %s331
        %p333 = scmp.lt.s32.totalorder %s26, 3
        %s334 = scalar_select %p333, %s26, 3
        %p335 = scmp.lt.s32.totalorder %s27, 0
        %s336 = scalar_select %p335, %s27, 0
        %s337 = sadd.s32 %s336, %s334
        %s338 = smul.addr %s337, 8
        %s339 = scalar_lea.vmem %s4, %s338
        %v340 = vlaneseq
        %v341 = vshrl.u32 %v340, 7
        %s342 = smul.u32 %s26, 8
        %v343 = vstv %s342
        %v344 = vadd.s32 %v341, %v343
        %vm345 = vcmp.lt.s32.totalorder %v344, 32
        %v346 = vlaneseq
        %v347 = vand.u32 %v346, 127
        %s348 = smul.u32 %s27, 8
        %v349 = vstv %s348
        %v350 = vadd.s32 %v347, %v349
        %vm351 = vcmp.lt.s32.totalorder %v350, 8
        %v352 = vsel %vm345, 1, 0
        %vm353 = vcmp.eq.s32.totalorder %v352, 1
        %vm354 = vmand %vm351, %vm353
        %v355 = vld [vmem:[%s323] sm:$0xff]
        %v357 = vrot.slane %v355, 1
        %v358 = vrot.slane %v355, 2
        %v359 = vrot.slane %v355, 3
        %v360 = vrot.slane %v355, 4
        %v361 = vrot.slane %v355, 5
        %v362 = vrot.slane %v355, 6
        %v363 = vrot.slane %v355, 7
        %v364 = vld [vmem:[%s273] sm:$0xff]
        %v365 = vld [vmem:[%s273 + $0x8] sm:$0xff]
        %v366 = vld [vmem:[%s273 + $0x10] sm:$0xff]
        %v367 = vld [vmem:[%s273 + $0x18] sm:$0xff]
        %v368 = vld [vmem:[%s273 + $0x20] sm:$0xff]
        %v369 = vld [vmem:[%s273 + $0x28] sm:$0xff]
        %v370 = vld [vmem:[%s273 + $0x30] sm:$0xff]
        %v371 = vld [vmem:[%s273 + $0x38] sm:$0xff]
        %vm372 = vcmask 261120
        %v373 = vsel %vm372, %v355, 0
        %v376 = vsel %vm372, %v364, 0
        %378 = vmatpush.xpose.msra.mxu0 0.0
        %379 = vmatpush.xpose.msra.mxu0 0.0
        %380 = vmatpush.xpose.msra.mxu0 0.0
        %381 = vmatpush.xpose.msra.mxu0 0.0
        %382 = vmatpush.xpose.msra.mxu0 0.0
        %383 = vmatpush.xpose.msra.mxu0 0.0
        %384 = vmatpush.xpose.msra.mxu0 0.0
        %385 = vmatpush.xpose.msra.mxu0 0.0
        %386 = vmatpush.xpose.msra.mxu0 0.0
        %387 = vmatpush.xpose.msra.mxu0 0.0
        %388 = vmatpush.xpose.msra.mxu0 0.0
        %389 = vmatpush.xpose.msra.mxu0 0.0
        %390 = vmatpush.xpose.msra.mxu0 0.0
        %391 = vmatpush.xpose.msra.mxu0 0.0
        %392 = vmatpush.xpose.msra.mxu0 0.0
        %393 = vmatpush.xpose.msra.mxu0 %v376
        %394 = vmatmul.f32.gmra.mxu0 %v373
        %v395 = vpop.f32.mrf.mxu0
        %v396 = vadd.f32 0.0, %v395
        %397 = vdwg.mxu0
        %v398 = vsel %vm372, %v357, 0
        %v401 = vsel %vm372, %v365, 0
        %403 = vmatpush.xpose.msra.mxu0 0.0
        %404 = vmatpush.xpose.msra.mxu0 0.0
        %405 = vmatpush.xpose.msra.mxu0 0.0
        %406 = vmatpush.xpose.msra.mxu0 0.0
        %407 = vmatpush.xpose.msra.mxu0 0.0
        %408 = vmatpush.xpose.msra.mxu0 0.0
        %409 = vmatpush.xpose.msra.mxu0 0.0
        %410 = vmatpush.xpose.msra.mxu0 0.0
        %411 = vmatpush.xpose.msra.mxu0 0.0
        %412 = vmatpush.xpose.msra.mxu0 0.0
        %413 = vmatpush.xpose.msra.mxu0 0.0
        %414 = vmatpush.xpose.msra.mxu0 0.0
        %415 = vmatpush.xpose.msra.mxu0 0.0
        %416 = vmatpush.xpose.msra.mxu0 0.0
        %417 = vmatpush.xpose.msra.mxu0 0.0
        %418 = vmatpush.xpose.msra.mxu0 %v401
        %419 = vmatmul.f32.gmra.mxu0 %v398
        %v420 = vpop.f32.mrf.mxu0
        %v421 = vadd.f32 0.0, %v420
        %422 = vdwg.mxu0
        %v423 = vsel %vm372, %v358, 0
        %v426 = vsel %vm372, %v366, 0
        %428 = vmatpush.xpose.msra.mxu0 0.0
        %429 = vmatpush.xpose.msra.mxu0 0.0
        %430 = vmatpush.xpose.msra.mxu0 0.0
        %431 = vmatpush.xpose.msra.mxu0 0.0
        %432 = vmatpush.xpose.msra.mxu0 0.0
        %433 = vmatpush.xpose.msra.mxu0 0.0
        %434 = vmatpush.xpose.msra.mxu0 0.0
        %435 = vmatpush.xpose.msra.mxu0 0.0
        %436 = vmatpush.xpose.msra.mxu0 0.0
        %437 = vmatpush.xpose.msra.mxu0 0.0
        %438 = vmatpush.xpose.msra.mxu0 0.0
        %439 = vmatpush.xpose.msra.mxu0 0.0
        %440 = vmatpush.xpose.msra.mxu0 0.0
        %441 = vmatpush.xpose.msra.mxu0 0.0
        %442 = vmatpush.xpose.msra.mxu0 0.0
        %443 = vmatpush.xpose.msra.mxu0 %v426
        %444 = vmatmul.f32.gmra.mxu0 %v423
        %v445 = vpop.f32.mrf.mxu0
        %v446 = vadd.f32 0.0, %v445
        %447 = vdwg.mxu0
        %v448 = vsel %vm372, %v359, 0
        %v451 = vsel %vm372, %v367, 0
        %453 = vmatpush.xpose.msra.mxu0 0.0
        %454 = vmatpush.xpose.msra.mxu0 0.0
        %455 = vmatpush.xpose.msra.mxu0 0.0
        %456 = vmatpush.xpose.msra.mxu0 0.0
        %457 = vmatpush.xpose.msra.mxu0 0.0
        %458 = vmatpush.xpose.msra.mxu0 0.0
        %459 = vmatpush.xpose.msra.mxu0 0.0
        %460 = vmatpush.xpose.msra.mxu0 0.0
        %461 = vmatpush.xpose.msra.mxu0 0.0
        %462 = vmatpush.xpose.msra.mxu0 0.0
        %463 = vmatpush.xpose.msra.mxu0 0.0
        %464 = vmatpush.xpose.msra.mxu0 0.0
        %465 = vmatpush.xpose.msra.mxu0 0.0
        %466 = vmatpush.xpose.msra.mxu0 0.0
        %467 = vmatpush.xpose.msra.mxu0 0.0
        %468 = vmatpush.xpose.msra.mxu0 %v451
        %469 = vmatmul.f32.gmra.mxu0 %v448
        %v470 = vpop.f32.mrf.mxu0
        %v471 = vadd.f32 0.0, %v470
        %472 = vdwg.mxu0
        %v473 = vsel %vm372, %v360, 0
        %v476 = vsel %vm372, %v368, 0
        %478 = vmatpush.xpose.msra.mxu0 0.0
        %479 = vmatpush.xpose.msra.mxu0 0.0
        %480 = vmatpush.xpose.msra.mxu0 0.0
        %481 = vmatpush.xpose.msra.mxu0 0.0
        %482 = vmatpush.xpose.msra.mxu0 0.0
        %483 = vmatpush.xpose.msra.mxu0 0.0
        %484 = vmatpush.xpose.msra.mxu0 0.0
        %485 = vmatpush.xpose.msra.mxu0 0.0
        %486 = vmatpush.xpose.msra.mxu0 0.0
        %487 = vmatpush.xpose.msra.mxu0 0.0
        %488 = vmatpush.xpose.msra.mxu0 0.0
        %489 = vmatpush.xpose.msra.mxu0 0.0
        %490 = vmatpush.xpose.msra.mxu0 0.0
        %491 = vmatpush.xpose.msra.mxu0 0.0
        %492 = vmatpush.xpose.msra.mxu0 0.0
        %493 = vmatpush.xpose.msra.mxu0 %v476
        %494 = vmatmul.f32.gmra.mxu0 %v473
        %v495 = vpop.f32.mrf.mxu0
        %v496 = vadd.f32 0.0, %v495
        %497 = vdwg.mxu0
        %v498 = vsel %vm372, %v361, 0
        %v501 = vsel %vm372, %v369, 0
        %503 = vmatpush.xpose.msra.mxu0 0.0
        %504 = vmatpush.xpose.msra.mxu0 0.0
        %505 = vmatpush.xpose.msra.mxu0 0.0
        %506 = vmatpush.xpose.msra.mxu0 0.0
        %507 = vmatpush.xpose.msra.mxu0 0.0
        %508 = vmatpush.xpose.msra.mxu0 0.0
        %509 = vmatpush.xpose.msra.mxu0 0.0
        %510 = vmatpush.xpose.msra.mxu0 0.0
        %511 = vmatpush.xpose.msra.mxu0 0.0
        %512 = vmatpush.xpose.msra.mxu0 0.0
        %513 = vmatpush.xpose.msra.mxu0 0.0
        %514 = vmatpush.xpose.msra.mxu0 0.0
        %515 = vmatpush.xpose.msra.mxu0 0.0
        %516 = vmatpush.xpose.msra.mxu0 0.0
        %517 = vmatpush.xpose.msra.mxu0 0.0
        %518 = vmatpush.xpose.msra.mxu0 %v501
        %519 = vmatmul.f32.gmra.mxu0 %v498
        %v520 = vpop.f32.mrf.mxu0
        %v521 = vadd.f32 0.0, %v520
        %522 = vdwg.mxu0
        %v523 = vsel %vm372, %v362, 0
        %v526 = vsel %vm372, %v370, 0
        %528 = vmatpush.xpose.msra.mxu0 0.0
        %529 = vmatpush.xpose.msra.mxu0 0.0
        %530 = vmatpush.xpose.msra.mxu0 0.0
        %531 = vmatpush.xpose.msra.mxu0 0.0
        %532 = vmatpush.xpose.msra.mxu0 0.0
        %533 = vmatpush.xpose.msra.mxu0 0.0
        %534 = vmatpush.xpose.msra.mxu0 0.0
        %535 = vmatpush.xpose.msra.mxu0 0.0
        %536 = vmatpush.xpose.msra.mxu0 0.0
        %537 = vmatpush.xpose.msra.mxu0 0.0
        %538 = vmatpush.xpose.msra.mxu0 0.0
        %539 = vmatpush.xpose.msra.mxu0 0.0
        %540 = vmatpush.xpose.msra.mxu0 0.0
        %541 = vmatpush.xpose.msra.mxu0 0.0
        %542 = vmatpush.xpose.msra.mxu0 0.0
        %543 = vmatpush.xpose.msra.mxu0 %v526
        %544 = vmatmul.f32.gmra.mxu0 %v523
        %v545 = vpop.f32.mrf.mxu0
        %v546 = vadd.f32 0.0, %v545
        %547 = vdwg.mxu0
        %v548 = vsel %vm372, %v363, 0
        %v551 = vsel %vm372, %v371, 0
        %553 = vmatpush.xpose.msra.mxu0 0.0
        %554 = vmatpush.xpose.msra.mxu0 0.0
        %555 = vmatpush.xpose.msra.mxu0 0.0
        %556 = vmatpush.xpose.msra.mxu0 0.0
        %557 = vmatpush.xpose.msra.mxu0 0.0
        %558 = vmatpush.xpose.msra.mxu0 0.0
        %559 = vmatpush.xpose.msra.mxu0 0.0
        %560 = vmatpush.xpose.msra.mxu0 0.0
        %561 = vmatpush.xpose.msra.mxu0 0.0
        %562 = vmatpush.xpose.msra.mxu0 0.0
        %563 = vmatpush.xpose.msra.mxu0 0.0
        %564 = vmatpush.xpose.msra.mxu0 0.0
        %565 = vmatpush.xpose.msra.mxu0 0.0
        %566 = vmatpush.xpose.msra.mxu0 0.0
        %567 = vmatpush.xpose.msra.mxu0 0.0
        %568 = vmatpush.xpose.msra.mxu0 %v551
        %569 = vmatmul.f32.gmra.mxu0 %v548
        %v570 = vpop.f32.mrf.mxu0
        %v571 = vadd.f32 0.0, %v570
        %572 = vdwg.mxu0
        %v581 = vrot.slane %v421, 7
        %vm582 = vcmask 1041409
        %v583 = vsel %vm582, %v581, %v396
        %v584 = vrot.slane %v446, 6
        %vm585 = vcmask 1042434
        %v586 = vsel %vm585, %v584, %v583
        %v587 = vrot.slane %v471, 5
        %vm588 = vcmask 1043459
        %v589 = vsel %vm588, %v587, %v586
        %v590 = vrot.slane %v496, 4
        %vm591 = vcmask 1044484
        %v592 = vsel %vm591, %v590, %v589
        %v593 = vrot.slane %v521, 3
        %vm594 = vcmask 1045509
        %v595 = vsel %vm594, %v593, %v592
        %v596 = vrot.slane %v546, 2
        %vm597 = vcmask 1046534
        %v598 = vsel %vm597, %v596, %v595
        %v599 = vrot.slane %v571, 1
        %vm600 = vcmask 1047559
        %v601 = vsel %vm600, %v599, %v598
        %v603 = vsel %vm354, %v601, 0.0
        %v604 = vld [vmem:[%s339] sm:$0xff]
        %v605 = vsel %vm354, %v604, 0.0
        %v606 = vmax.f32 %v603, 0.0
        %v607 = vand.u32 2147483647, %v603
        %v608 = vsub.f32 0.0, %v607
        %v609 = vmul.f32 %v608, 1.442695
        %v610 = vpow.pop %v609
        %v611 = vadd.f32 %v610, 1.0
        %v612 = vlog2.pop %v611
        %v613 = vmul.f32 %v612, 0.6931472
        %v614 = vmul.f32 -0.5, %v610
        %v615 = vadd.f32 %v614, 1.0
        %v616 = vmul.f32 %v615, %v610
        %v617 = vand.u32 2147483647, %v610
        %vm618 = vcmp.lt.f32.partialorder %v617, 0.0004427343
        %v619 = vsel %vm618, %v616, %v613
        %v620 = vadd.f32 %v606, %v619
        %v621 = vmul.f32 %v605, %v620
        %vm622 = vcmask 64512
        %v623 = vsel %vm622, %v621, 0.0
        %624 = vadd.xlane.f32.xlu0 %v623
        %v625 = vpop.xlane.xlu0 %624
        %v626 = vrot.slane %v625, 4
        %v627 = vadd.f32 %v625, %v626
        %v628 = vrot.slane %v627, 2
        %v629 = vadd.f32 %v627, %v628
        %v630 = vrot.slane %v629, 1
        %v631 = vadd.f32 %v629, %v630
        %s632 = vtos %v631
        %v633 = vld [vmem:[%s327] sm:$0xff]
        %v634 = vmul.f32 %v355, %v633
        %v635 = vsel %vm372, %v634, 0.0
        %636 = vadd.xlane.f32.xlu0 %v635
        %v637 = vpop.xlane.xlu0 %636
        %v638 = vsel %vm345, %v637, 0.0
        %v639 = vld [vmem:[%s332] sm:$0xff]
        %v640 = vsel %vm345, %v639, 0.0
        %v641 = vsub.f32 0.0, %v638
        %v642 = vmax.f32 %v641, 0.0
        %v643 = vand.u32 2147483647, %v641
        %v644 = vsub.f32 0.0, %v643
        %v645 = vmul.f32 %v644, 1.442695
        %v646 = vpow.pop %v645
        %v647 = vadd.f32 %v646, 1.0
        %v648 = vlog2.pop %v647
        %v649 = vmul.f32 %v648, 0.6931472
        %v650 = vmul.f32 -0.5, %v646
        %v651 = vadd.f32 %v650, 1.0
        %v652 = vmul.f32 %v651, %v646
        %v653 = vand.u32 2147483647, %v646
        %vm654 = vcmp.lt.f32.partialorder %v653, 0.0004427343
        %v655 = vsel %vm654, %v652, %v649
        %v656 = vadd.f32 %v642, %v655
        %v657 = vmul.f32 %v640, %v656
        %vm658 = vcmask 7168
        %v659 = vsel %vm658, %v657, 0.0
        %660 = vadd.xlane.f32.xlu0 %v659
        %v661 = vpop.xlane.xlu0 %660
        %v662 = vrot.slane %v661, 4
        %v663 = vadd.f32 %v661, %v662
        %v664 = vrot.slane %v663, 2
        %v665 = vadd.f32 %v663, %v664
        %v666 = vrot.slane %v665, 1
        %v667 = vadd.f32 %v665, %v666
        %s668 = vtos %v667
        %p669 = scmp.eq.s32.totalorder %s27, 0
        %s670 = scalar_select %p669, %s668, 0.0
        %s671 = sadd.f32 %s632, %s670
        %vm672 = vcmp.eq.s32.totalorder %v341, 0
        %vm673 = vcmp.eq.s32.totalorder %v347, 0
        %vm674 = vmand %vm672, %vm673
        %v675 = vstv %s671
        %v676 = vsel %vm674, %v675, 0.0
        // Predicated region
        $region45: #{tpu_custom_call.1} parent=39 // pred_check
          %p677 = pneg %p669
        $region46: #{tpu_custom_call.1} parent=39 // pred_check_branch
          %679 = sbr.rel (%p677) target = $region48
        $region47: #{tpu_custom_call.1} parent=39 // pred_region
          %680 = vst [vmem:[%s319] sm:$0xff] %v676
        $region48: #{tpu_custom_call.1} parent=39 // pred_fallthru
          _
        %p681 = scmp.gt.s32.totalorder %s27, 0
        // Predicated region
        $region49: #{tpu_custom_call.1} parent=39 // pred_check
          %p682 = pneg %p681
        $region50: #{tpu_custom_call.1} parent=39 // pred_check_branch
          %684 = sbr.rel (%p682) target = $region52
        $region51: #{tpu_custom_call.1} parent=39 // pred_region
          %v685 = vld [vmem:[%s319] sm:$0xff]
          %v686 = vadd.f32 %v685, %v676
          %687 = vst [vmem:[%s319] sm:$0xff] %v686
        $region52: #{tpu_custom_call.1} parent=39 // pred_fallthru
          _
        %s688 = sand.u32 %s176, 1
        %s689 = scalar_lea.sflag [#allocation4], %s688
        %s690 = sand.u32 %s176, 1
        %s691 = smul.addr %s690, 8
        %s692 = scalar_lea.vmem [#allocation5], %s691
        // Predicated region
        $region53: #{tpu_custom_call.1} parent=39 // pred_check
          %p693 = pneg %p186
        $region54: #{tpu_custom_call.1} parent=39 // pred_check_branch
          %695 = sbr.rel (%p693) target = $region56
        $region55: #{tpu_custom_call.1} parent=39 // pred_region
          %697 = vsyncadd %s689, 0
          %s698 = smul.addr %s26, 8
          %s699 = scalar_lea.hbm %s5, %s698
          %s701 = sshll.u32 %s692, 4
          %s702 = int_to_ptr.vmem [resolvable:$true] %s701
          %s703 = sshll.u32 %s699, 4
          %s704 = int_to_ptr.hbm [resolvable:$true] %s703
          %706 = dma.vmem_to_hbm [thread:$0]  %s702, 128, %s704, %s689
        $region56: #{tpu_custom_call.1} parent=39 // pred_fallthru
          _
      $region40: #{tpu_custom_call.1} parent=5 // pred_fallthru
        _
      %p707 = scmp.le.s32.totalorder 2, %s17
      // Predicated region
      $region57: #{tpu_custom_call.1} parent=5 // pred_check
        %p708 = pneg %p707
      $region58: #{tpu_custom_call.1} parent=5 // pred_check_branch
        %710 = sbr.rel (%p708) target = $region60
      $region59: #{tpu_custom_call.1} parent=5 // pred_region
        %s711 = ssub.s32 %s17, 2
        // Predicated region
        $region61: #{tpu_custom_call.1} parent=59 // pred_check
          %p712 = pneg %p192
        $region62: #{tpu_custom_call.1} parent=59 // pred_check_branch
          %714 = sbr.rel (%p712) target = $region64
        $region63: #{tpu_custom_call.1} parent=59 // pred_region
          %s715 = sand.u32 %s177, 1
          %s716 = scalar_lea.sflag [#allocation4], %s715
          %s717 = sand.u32 %s177, 1
          %s718 = smul.addr %s717, 8
          %s719 = scalar_lea.vmem [#allocation5], %s718
          %721 = dma.done %s716, 128
        $region64: #{tpu_custom_call.1} parent=59 // pred_fallthru
          _
      $region60: #{tpu_custom_call.1} parent=5 // pred_fallthru
        _
    $region6: #{tpu_custom_call.1} parent=1 // loop_footer
      %s21 = sadd.s32 1, %s17
    $region7: #{tpu_custom_call.1} parent=1 // loop_footer_branch
      %16 = sbr.rel target = $region3
    $region8: #{tpu_custom_call.1} parent=1 // loop_exit
      _
    %722 = vsyncpa [#allocation3], 1
    %s723 = scalar_lea.sflag [#allocation3], 1
    %724 = vsyncpa %s723, 1
    %725 = vsyncpa [#allocation4], 1
    %s726 = scalar_lea.sflag [#allocation4], 1
    %727 = vsyncpa %s726, 1

</llo_original>
